<compile_context>
chip_gen: v7x
topology: tpu7x:2x2x1
jax: 0.10.0
libtpu: 0.0.40
codegen_flags: <defaults>
</compile_context>

<pallas_src>
import functools

import jax
import jax.numpy as jnp
from jax.experimental import pallas as pl
from jax.experimental.pallas import tpu as pltpu


def _round_up(x, m):
    return ((x + m - 1) // m) * m


def _cnn_kernel(x_ref, w_ref, b_ref, o_ref, *, l_out, e_word_p):
    # x_ref: (TILE_N, m_word*e_char)            VMEM (lane-dense input tile)
    # w_ref: (m_word*e_char, l_out*e_word_p)    VMEM (resident block-Toeplitz weight)
    # b_ref: (1, e_word_p)                      VMEM
    # o_ref: (TILE_N, e_word_p)                 VMEM (lane-dense output tile)

    # Conv1d for every output position t, as ONE MXU matmul:
    # column block [t*e_word_p:(t+1)*e_word_p] of `conv` is the conv output at t.
    conv = jnp.dot(x_ref[...], w_ref[...],
                   preferred_element_type=jnp.float32)      # (TILE_N, l_out*e_word_p)

    # Full-length MaxPool1d: running max over aligned 128-lane slices (pure VPU).
    pooled = conv[:, 0:e_word_p]
    for t in range(1, l_out):                                # small static unroll
        pooled = jnp.maximum(pooled, conv[:, t * e_word_p:(t + 1) * e_word_p])

    # Bias + ReLU after the pool (exactly equivalent: bias is constant over the
    # pooled axis and ReLU is monotone -> max_t relu(c_t+b) == relu(max_t c_t + b)).
    o_ref[...] = jnp.maximum(pooled + b_ref[...].astype(jnp.float32),
                             0.0).astype(o_ref.dtype)


def _build_toeplitz_weight(weight, e_word_p, l_out):
    """Fold the im2col into the weight: (e_word, e_char, k) torch Conv1d weight
    -> block-Toeplitz (m_word*e_char, l_out*e_word_p) matrix.  Pure parameter
    preprocessing (done once, independent of batch)."""
    e_word, e_char, k = weight.shape
    m_word = l_out + k - 1
    w_kce = jnp.transpose(weight, (2, 1, 0))                       # (k, e_char, e_word)
    w_kce = jnp.pad(w_kce, ((0, 0), (0, 0), (0, e_word_p - e_word)))
    w_big = jnp.zeros((m_word, e_char, l_out, e_word_p), weight.dtype)
    for t in range(l_out):
        w_big = w_big.at[t:t + k, :, t, :].set(w_kce)
    return w_big.reshape(m_word * e_char, l_out * e_word_p)


def cnn_forward(x_ncl, weight, bias, *, tile_n=256):
    """x_ncl: (N, e_char, m_word) like torch Conv1d input.
    weight: (e_word, e_char, k) like torch Conv1d weight.
    bias:   (e_word,)
    returns (N, e_word), same as torch.squeeze(maxpool(relu(conv(x))))."""
    N, e_char, m_word = x_ncl.shape
    e_word, _, k = weight.shape
    l_out = m_word - k + 1
    e_word_p = _round_up(e_word, 128)            # lane-dense output

    # Layout plumbing: NCL -> NLC -> flat (N, m_word*e_char) lane-dense rows.
    x_flat = jnp.transpose(x_ncl, (0, 2, 1)).reshape(N, m_word * e_char)

    # Tile/pad the batch axis (tail tile handled by zero-padding; pad rows only
    # ever produce relu(bias) and are sliced off below).
    tile_n = _round_up(min(tile_n, _round_up(N, 8)), 8)
    n_pad = _round_up(N, tile_n)
    if n_pad != N:
        x_flat = jnp.pad(x_flat, ((0, n_pad - N), (0, 0)))

    w_big = _build_toeplitz_weight(weight, e_word_p, l_out)
    b_pad = jnp.pad(bias, (0, e_word_p - e_word)).reshape(1, e_word_p)

    kernel = functools.partial(_cnn_kernel, l_out=l_out, e_word_p=e_word_p)

    out = pl.pallas_call(
        kernel,
        out_shape=jax.ShapeDtypeStruct((n_pad, e_word_p), x_ncl.dtype),
        grid_spec=pltpu.PrefetchScalarGridSpec(
            num_scalar_prefetch=0,
            grid=(n_pad // tile_n,),
            in_specs=[
                pl.BlockSpec((tile_n, m_word * e_char), lambda i: (i, 0)),
                pl.BlockSpec((m_word * e_char, l_out * e_word_p), lambda i: (0, 0)),
                pl.BlockSpec((1, e_word_p), lambda i: (0, 0)),
            ],
            out_specs=pl.BlockSpec((tile_n, e_word_p), lambda i: (i, 0)),
        ),
        compiler_params=pltpu.CompilerParams(
            dimension_semantics=("parallel",)),
    )(x_flat, w_big, b_pad)

    return out[:N, :e_word]


def _reference(x_ncl, weight, bias):
    # Pure-JAX reference of the PyTorch forward (for correctness check).
    N, e_char, m_word = x_ncl.shape
    e_word, _, k = weight.shape
    l_out = m_word - k + 1
    w2 = weight.reshape(e_word, e_char * k)
    cols = []
    for t in range(l_out):
        patch = x_ncl[:, :, t:t + k].reshape(N, e_char * k)       # (N, e_char*k)
        cols.append(patch @ w2.T + bias)                          # (N, e_word)
    conv = jnp.stack(cols, axis=-1)                               # (N, e_word, l_out)
    return jnp.max(jnp.maximum(conv, 0.0), axis=-1)               # (N, e_word)


if __name__ == "__main__":
    # Small shapes consistent with the module's forward.  N=20 with tile_n=8
    # deliberately exercises the multi-tile pipelined grid AND the padded tail.
    batch, e_char, m_word = 20, 16, 12
    e_word, kernel_size = 32, 5

    key = jax.random.PRNGKey(0)
    kx, kw, kb = jax.random.split(key, 3)

    x = jax.random.normal(kx, (batch, e_char, m_word), dtype=jnp.float32)

    # Deterministic Conv1d-style init (PyTorch default: U(-b, b), b=1/sqrt(fan_in)).
    fan_in = e_char * kernel_size
    bound = 1.0 / jnp.sqrt(jnp.float32(fan_in))
    weight = jax.random.uniform(kw, (e_word, e_char, kernel_size),
                                minval=-bound, maxval=bound, dtype=jnp.float32)
    bias = jax.random.uniform(kb, (e_word,), minval=-bound, maxval=bound,
                              dtype=jnp.float32)

    out = cnn_forward(x, weight, bias, tile_n=8)
    out = jax.block_until_ready(out)

    ref = _reference(x, weight, bias)
    assert out.shape == (batch, e_word), out.shape
    assert jnp.allclose(out, ref, atol=1e-4, rtol=1e-4), float(jnp.max(jnp.abs(out - ref)))

    print("KERNEL_OK")
</pallas_src>

<mosaic_0001>
module attributes {stable_mosaic.version = 11 : i64} {
  func.func @_cnn_kernel(%arg0: i32, %arg1: memref<8x192xf32, #tpu.memory_space<vmem>>, %arg2: memref<192x1024xf32, #tpu.memory_space<vmem>>, %arg3: memref<1x128xf32, #tpu.memory_space<vmem>>, %arg4: memref<8x128xf32, #tpu.memory_space<vmem>>) attributes {dimension_semantics = [#tpu.dimension_semantics<parallel>], iteration_bounds = array<i64: 3>, scalar_prefetch = 0 : i64, scratch_operands = 0 : i64, tpu.core_type = #tpu.core_type<tc>, window_params = [{transform_indices = @transform_0, window_bounds = array<i64: 8, 192>}, {pipeline_mode = #tpu.pipeline_mode<synchronous>, transform_indices = @transform_1, window_bounds = array<i64: 192, 1024>}, {pipeline_mode = #tpu.pipeline_mode<synchronous>, transform_indices = @transform_2, window_bounds = array<i64: 1, 128>}, {transform_indices = @transform_3, window_bounds = array<i64: 8, 128>}]} {
    %c0 = arith.constant 0 : index
    %c0_0 = arith.constant 0 : index
    %0 = vector.load %arg1[%c0, %c0_0] : memref<8x192xf32, #tpu.memory_space<vmem>>, vector<8x192xf32>
    %c0_1 = arith.constant 0 : index
    %c0_2 = arith.constant 0 : index
    %1 = vector.load %arg2[%c0_1, %c0_2] : memref<192x1024xf32, #tpu.memory_space<vmem>>, vector<192x1024xf32>
    %cst = arith.constant dense<0.000000e+00> : vector<8x1024xf32>
    %2 = tpu.matmul %0, %1, %cst {dimension_numbers = #tpu.dot_dimension_numbers<[1], [0], [0], [1], [0, 0, 1, 1], [], []>} : vector<8x192xf32>, vector<192x1024xf32>, vector<8x1024xf32> -> vector<8x1024xf32>
    %3 = vector.extract_strided_slice %2 {offsets = [0, 0], sizes = [8, 128], strides = [1, 1]} : vector<8x1024xf32> to vector<8x128xf32>
    %4 = vector.extract_strided_slice %2 {offsets = [0, 128], sizes = [8, 128], strides = [1, 1]} : vector<8x1024xf32> to vector<8x128xf32>
    %5 = arith.maximumf %3, %4 : vector<8x128xf32>
    %6 = vector.extract_strided_slice %2 {offsets = [0, 256], sizes = [8, 128], strides = [1, 1]} : vector<8x1024xf32> to vector<8x128xf32>
    %7 = arith.maximumf %5, %6 : vector<8x128xf32>
    %8 = vector.extract_strided_slice %2 {offsets = [0, 384], sizes = [8, 128], strides = [1, 1]} : vector<8x1024xf32> to vector<8x128xf32>
    %9 = arith.maximumf %7, %8 : vector<8x128xf32>
    %10 = vector.extract_strided_slice %2 {offsets = [0, 512], sizes = [8, 128], strides = [1, 1]} : vector<8x1024xf32> to vector<8x128xf32>
    %11 = arith.maximumf %9, %10 : vector<8x128xf32>
    %12 = vector.extract_strided_slice %2 {offsets = [0, 640], sizes = [8, 128], strides = [1, 1]} : vector<8x1024xf32> to vector<8x128xf32>
    %13 = arith.maximumf %11, %12 : vector<8x128xf32>
    %14 = vector.extract_strided_slice %2 {offsets = [0, 768], sizes = [8, 128], strides = [1, 1]} : vector<8x1024xf32> to vector<8x128xf32>
    %15 = arith.maximumf %13, %14 : vector<8x128xf32>
    %16 = vector.extract_strided_slice %2 {offsets = [0, 896], sizes = [8, 128], strides = [1, 1]} : vector<8x1024xf32> to vector<8x128xf32>
    %17 = arith.maximumf %15, %16 : vector<8x128xf32>
    %c0_3 = arith.constant 0 : index
    %c0_4 = arith.constant 0 : index
    %18 = vector.load %arg3[%c0_3, %c0_4] : memref<1x128xf32, #tpu.memory_space<vmem>>, vector<1x128xf32>
    %19 = vector.broadcast %18 : vector<1x128xf32> to vector<8x128xf32>
    %20 = arith.addf %17, %19 : vector<8x128xf32>
    %cst_5 = arith.constant 0.000000e+00 : f32
    %21 = vector.broadcast %cst_5 : f32 to vector<8x128xf32>
    %22 = arith.maximumf %20, %21 : vector<8x128xf32>
    %c0_6 = arith.constant 0 : index
    %c0_7 = arith.constant 0 : index
    %23 = vector.load %arg4[%c0_6, %c0_7] : memref<8x128xf32, #tpu.memory_space<vmem>>, vector<8x128xf32>
    tpu.vector_store %arg4[%c0_6, %c0_7], %22 {strides = array<i32>} : memref<8x128xf32, #tpu.memory_space<vmem>>, vector<8x128xf32>,
    return
  }
  func.func @transform_0(%arg0: i32) -> (i32, i32) {
    %c0_i32 = arith.constant 0 : i32
    %c0_i32_0 = arith.constant 0 : i32
    return %arg0, %c0_i32 : i32, i32
  }
  func.func @transform_1(%arg0: i32) -> (i32, i32) {
    %c0_i32 = arith.constant 0 : i32
    %c0_i32_0 = arith.constant 0 : i32
    %c0_i32_1 = arith.constant 0 : i32
    return %c0_i32, %c0_i32_0 : i32, i32
  }
  func.func @transform_2(%arg0: i32) -> (i32, i32) {
    %c0_i32 = arith.constant 0 : i32
    %c0_i32_0 = arith.constant 0 : i32
    %c0_i32_1 = arith.constant 0 : i32
    return %c0_i32, %c0_i32_0 : i32, i32
  }
  func.func @transform_3(%arg0: i32) -> (i32, i32) {
    %c0_i32 = arith.constant 0 : i32
    %c0_i32_0 = arith.constant 0 : i32
    return %arg0, %c0_i32 : i32, i32
  }
}

</mosaic_0001>

<llo_original>
// kernel: tpu_custom_call.1
$region0: #{tpu_custom_call.1}
  #allocation0 [shape = 'u32[]', space=smem, size = 0x4, offset = 0x4, fixed_abs, tag = 'smem constant byte address 0x4 - core index']
  #allocation1 [shape = 'u32[144,128]{1,0:T(1,128)}', space=vmem, size = 0x12000, scoped, tag = 'internal scratch']
  %s0 = inlined_call_operand.hbm [shape: f32[24,192], index: 0, kind: input, shape index: {}]
  %s1 = inlined_call_operand.hbm [shape: f32[192,1024], index: 1, kind: input, shape index: {}]
  %s2 = inlined_call_operand.vmem [shape: f32[1,128], index: 2, kind: input, shape index: {}]
  %s3 = inlined_call_operand.hbm [shape: f32[24,128], index: 3, kind: output, shape index: {}]
  %s4 = sld [smem:[#allocation0]]
  $region53: #{tpu_custom_call.1} parent=0
    _
  %s6 = ssub.s32 1, %s4
  %s7 = scalar_select 0, %s6, %s4
  $region1: #{tpu_custom_call.1} parent=0
    #allocation2 [shape = 'u8[16384]{0}', space=vmem, size = 0x4000, scoped, tag = 'input window, operand 0']
    #allocation3 [shape = 's32[2]{0}', space=sflag, size = 0x8, scoped, tag = 'scoped memory for tpu_custom_call.1']
    #allocation4 [shape = 's32[2]{0}', space=sflag, size = 0x8, scoped, tag = 'scoped memory for tpu_custom_call.1']
    #allocation5 [shape = 'u8[786432]{0}', space=vmem, size = 0xc0000, scoped, tag = 'input window, operand 1, single buffered']
    #allocation6 [shape = 's32[1]{0}', space=sflag, size = 0x4, scoped, tag = 'scoped memory for tpu_custom_call.1']
    #allocation7 [shape = 'u8[8192]{0}', space=vmem, size = 0x2000, scoped, tag = 'output window, operand 0']
    %8 = vsyncpa [#allocation3], 0
    %s9 = scalar_lea.sflag [#allocation3], 1
    %10 = vsyncpa %s9, 0
    %11 = vsyncpa [#allocation6], 0
    %12 = vsyncpa [#allocation4], 0
    %s13 = scalar_lea.sflag [#allocation4], 1
    %14 = vsyncpa %s13, 0
    loop: start=0, step=1, limit=5
    $region2: #{tpu_custom_call.1} parent=1 // loop_pre_header
      _
    $region3: #{tpu_custom_call.1} parent=1 // loop_header
      %s16 = sphi 0, %s20
      %p17 = scmp.ge.s32.totalorder %s16, 5
      %s26 = sphi 0, %s28
      %s29 = sphi 0, %s26
      %s30 = sphi 0, %s29
      %s46 = sphi 0, %s30
      %s50 = sphi 0, %s50
      %s52 = sphi 0, %s50
      %s53 = sphi 0, %s52
      %s67 = sphi 0, %s53
      %s71 = sphi 0, %s71
      %s73 = sphi 0, %s71
      %s74 = sphi 0, %s73
      %s88 = sphi 0, %s74
      %s94 = sphi 0, %s96
      %s97 = sphi 0, %s94
      %s98 = sphi 0, %s97
      %s114 = sphi 0, %s98
    $region4: #{tpu_custom_call.1} parent=1 // loop_header_branch
      %19 = sbr.rel (%p17) target = $region8
    $region5: #{tpu_custom_call.1} parent=1 // loop_body
      %s21 = ssub.s32 %s16, 1
      %s22 = ssub.s32 %s16, 2
      %s23 = sadd.s32 %s16, 1
      %s24 = ssub.s32 %s16, %s23
      %p25 = scmp.eq.s32.totalorder %s24, 0
      %s27 = sadd.s32 %s26, 1
      %s28 = scalar_select %p25, %s26, %s27
      %p31 = pneg %p25
      %p32 = scmp.eq.s32.totalorder %s16, 2
      %p33 = por %p31, %p32
      %p34 = scmp.ne.s32.totalorder %s26, %s29
      %p35 = scmp.eq.s32.totalorder %s16, 0
      %p36 = por %p34, %p35
      %p37 = scmp.ne.s32.totalorder %s26, %s29
      %p38 = scmp.eq.s32.totalorder %s21, 2
      %p39 = por %p37, %p38
      %p40 = scmp.ne.s32.totalorder %s29, %s30
      %p41 = scmp.eq.s32.totalorder %s21, 0
      %p42 = por %p40, %p41
      %p43 = scmp.ne.s32.totalorder %s29, %s30
      %p44 = scmp.eq.s32.totalorder %s22, 2
      %p45 = por %p43, %p44
      %p47 = scmp.ne.s32.totalorder %s30, %s46
      %p48 = scmp.eq.s32.totalorder %s22, 0
      %p49 = por %p47, %p48
      %s51 = sadd.s32 %s50, 1
      %p54 = scmp.eq.s32.totalorder %s16, 2
      %p55 = scmp.ne.s32.totalorder %s50, %s52
      %p56 = scmp.eq.s32.totalorder %s16, 0
      %p57 = por %p55, %p56
      %p58 = scmp.ne.s32.totalorder %s50, %s52
      %p59 = scmp.eq.s32.totalorder %s21, 2
      %p60 = por %p58, %p59
      %p61 = scmp.ne.s32.totalorder %s52, %s53
      %p62 = scmp.eq.s32.totalorder %s21, 0
      %p63 = por %p61, %p62
      %p64 = scmp.ne.s32.totalorder %s52, %s53
      %p65 = scmp.eq.s32.totalorder %s22, 2
      %p66 = por %p64, %p65
      %p68 = scmp.ne.s32.totalorder %s53, %s67
      %p69 = scmp.eq.s32.totalorder %s22, 0
      %p70 = por %p68, %p69
      %s72 = sadd.s32 %s71, 1
      %p75 = scmp.eq.s32.totalorder %s16, 2
      %p76 = scmp.ne.s32.totalorder %s71, %s73
      %p77 = scmp.eq.s32.totalorder %s16, 0
      %p78 = por %p76, %p77
      %p79 = scmp.ne.s32.totalorder %s71, %s73
      %p80 = scmp.eq.s32.totalorder %s21, 2
      %p81 = por %p79, %p80
      %p82 = scmp.ne.s32.totalorder %s73, %s74
      %p83 = scmp.eq.s32.totalorder %s21, 0
      %p84 = por %p82, %p83
      %p85 = scmp.ne.s32.totalorder %s73, %s74
      %p86 = scmp.eq.s32.totalorder %s22, 2
      %p87 = por %p85, %p86
      %p89 = scmp.ne.s32.totalorder %s74, %s88
      %p90 = scmp.eq.s32.totalorder %s22, 0
      %p91 = por %p89, %p90
      %s92 = ssub.s32 %s16, %s23
      %p93 = scmp.eq.s32.totalorder %s92, 0
      %s95 = sadd.s32 %s94, 1
      %s96 = scalar_select %p93, %s94, %s95
      %p99 = pneg %p93
      %p100 = scmp.eq.s32.totalorder %s16, 2
      %p101 = por %p99, %p100
      %p102 = scmp.ne.s32.totalorder %s94, %s97
      %p103 = scmp.eq.s32.totalorder %s16, 0
      %p104 = por %p102, %p103
      %p105 = scmp.ne.s32.totalorder %s94, %s97
      %p106 = scmp.eq.s32.totalorder %s21, 2
      %p107 = por %p105, %p106
      %p108 = scmp.ne.s32.totalorder %s97, %s98
      %p109 = scmp.eq.s32.totalorder %s21, 0
      %p110 = por %p108, %p109
      %p111 = scmp.ne.s32.totalorder %s97, %s98
      %p112 = scmp.eq.s32.totalorder %s22, 2
      %p113 = por %p111, %p112
      %p115 = scmp.ne.s32.totalorder %s98, %s114
      %p116 = scmp.eq.s32.totalorder %s22, 0
      %p117 = por %p115, %p116
      %p118 = scmp.le.s32.totalorder 1, %s16
      %p119 = scmp.lt.s32.totalorder %s16, 4
      %p120 = pnand %p118, %p119
      %p121 = pneg %p120
      // Predicated region
      $region9: #{tpu_custom_call.1} parent=5 // pred_check
        _
      $region10: #{tpu_custom_call.1} parent=5 // pred_check_branch
        %123 = sbr.rel (%p120) target = $region12
      $region11: #{tpu_custom_call.1} parent=5 // pred_region
        %s124 = ssub.s32 %s16, 1
        // Predicated region
        $region13: #{tpu_custom_call.1} parent=11 // pred_check
          %p125 = pneg %p63
        $region14: #{tpu_custom_call.1} parent=11 // pred_check_branch
          %127 = sbr.rel (%p125) target = $region16
        $region15: #{tpu_custom_call.1} parent=11 // pred_region
          %s129 = ssub.s32 24576, 24576
          %130 = vsyncadd [#allocation6], %s129
          %s131 = sshll.u32 [#allocation5], 4
          %s132 = int_to_ptr.vmem [resolvable:$true] %s131
          %137 = dma.hbm_to_vmem [thread:$0]  %s1, 24576, %s132, [#allocation6], 1024, 1024, 64
        $region16: #{tpu_custom_call.1} parent=11 // pred_fallthru
          _
        // Predicated region
        $region17: #{tpu_custom_call.1} parent=11 // pred_check
          %p138 = pneg %p84
        $region18: #{tpu_custom_call.1} parent=11 // pred_check_branch
          %140 = sbr.rel (%p138) target = $region20
        $region19: #{tpu_custom_call.1} parent=11 // pred_region
          _
        $region20: #{tpu_custom_call.1} parent=11 // pred_fallthru
          _
      $region12: #{tpu_custom_call.1} parent=5 // pred_fallthru
        _
      %p141 = scmp.lt.s32.totalorder %s16, 3
      // Predicated region
      $region21: #{tpu_custom_call.1} parent=5 // pred_check
        %p142 = pneg %p141
      $region22: #{tpu_custom_call.1} parent=5 // pred_check_branch
        %144 = sbr.rel (%p142) target = $region24
      $region23: #{tpu_custom_call.1} parent=5 // pred_region
        // Predicated region
        $region25: #{tpu_custom_call.1} parent=23 // pred_check
          %p145 = pneg %p36
        $region26: #{tpu_custom_call.1} parent=23 // pred_check_branch
          %147 = sbr.rel (%p145) target = $region28
        $region27: #{tpu_custom_call.1} parent=23 // pred_region
          %s148 = sand.u32 %s26, 1
          %s149 = scalar_lea.sflag [#allocation3], %s148
          %s150 = sand.u32 %s26, 1
          %s151 = smul.addr %s150, 16
          %s152 = scalar_lea.vmem [#allocation2], %s151
          %s154 = ssub.s32 256, 256
          %155 = vsyncadd %s149, %s154
          %s156 = smul.addr %s16, 2
          %s157 = smul.addr %s156, 128
          %s158 = scalar_lea.hbm %s0, %s157
          %s160 = sshll.u32 %s152, 4
          %s161 = int_to_ptr.vmem [resolvable:$true] %s160
          %163 = dma.hbm_to_vmem [thread:$0]  %s158, 256, %s161, %s149
        $region28: #{tpu_custom_call.1} parent=23 // pred_fallthru
          _
      $region24: #{tpu_custom_call.1} parent=5 // pred_fallthru
        _
      %p164 = scmp.le.s32.totalorder 1, %s16
      %p165 = scmp.lt.s32.totalorder %s16, 4
      %p166 = pnand %p164, %p165
      %p167 = pneg %p166
      // Predicated region
      $region29: #{tpu_custom_call.1} parent=5 // pred_check
        _
      $region30: #{tpu_custom_call.1} parent=5 // pred_check_branch
        %169 = sbr.rel (%p166) target = $region32
      $region31: #{tpu_custom_call.1} parent=5 // pred_region
        %s170 = ssub.s32 %s16, 1
        %s171 = sand.u32 %s29, 1
        %s172 = scalar_lea.sflag [#allocation3], %s171
        %s173 = sand.u32 %s29, 1
        %s174 = smul.addr %s173, 16
        %s175 = scalar_lea.vmem [#allocation2], %s174
        // Predicated region
        $region33: #{tpu_custom_call.1} parent=31 // pred_check
          %p176 = pneg %p42
        $region34: #{tpu_custom_call.1} parent=31 // pred_check_branch
          %178 = sbr.rel (%p176) target = $region36
        $region35: #{tpu_custom_call.1} parent=31 // pred_region
          %179 = dma.done %s172, 256
        $region36: #{tpu_custom_call.1} parent=31 // pred_fallthru
          _
        // Predicated region
        $region37: #{tpu_custom_call.1} parent=31 // pred_check
          %p180 = pneg %p63
        $region38: #{tpu_custom_call.1} parent=31 // pred_check_branch
          %182 = sbr.rel (%p180) target = $region40
        $region39: #{tpu_custom_call.1} parent=31 // pred_region
          %183 = dma.done [#allocation6], 24576
        $region40: #{tpu_custom_call.1} parent=31 // pred_fallthru
          _
        %s184 = sand.u32 %s29, 1
        %s185 = scalar_lea.sflag [#allocation3], %s184
        %s186 = sand.u32 %s29, 1
        %s187 = smul.addr %s186, 16
        %s188 = scalar_lea.vmem [#allocation2], %s187
        %p189 = pneg %p42
        %p190 = pneg %p39
        %p191 = pneg %p63
        %p192 = pneg %p60
        %p193 = pneg %p84
        %p194 = pneg %p81
        %p195 = pneg %p110
        %p196 = pneg %p107
        %s197 = sand.u32 %s97, 1
        %s198 = scalar_lea.sflag [#allocation4], %s197
        %s199 = sand.u32 %s97, 1
        %s200 = smul.addr %s199, 8
        %s201 = scalar_lea.vmem [#allocation7], %s200
        %v202 = vld [vmem:[%s175] sm:$0xff]
        %v203 = vld [vmem:[%s175 + $0x8] sm:$0xff]
        %v204 = vld [vmem:[#allocation5] sm:$0xff]
        %v205 = vld [vmem:[#allocation5 + $0x8] sm:$0xff]
        %v206 = vld [vmem:[#allocation5 + $0x10] sm:$0xff]
        %v207 = vld [vmem:[#allocation5 + $0x18] sm:$0xff]
        %v208 = vld [vmem:[#allocation5 + $0x20] sm:$0xff]
        %v209 = vld [vmem:[#allocation5 + $0x28] sm:$0xff]
        %v210 = vld [vmem:[#allocation5 + $0x30] sm:$0xff]
        %v211 = vld [vmem:[#allocation5 + $0x38] sm:$0xff]
        %v212 = vld [vmem:[#allocation5 + $0x40] sm:$0xff]
        %v213 = vld [vmem:[#allocation5 + $0x48] sm:$0xff]
        %v214 = vld [vmem:[#allocation5 + $0x50] sm:$0xff]
        %v215 = vld [vmem:[#allocation5 + $0x58] sm:$0xff]
        %v216 = vld [vmem:[#allocation5 + $0x60] sm:$0xff]
        %v217 = vld [vmem:[#allocation5 + $0x68] sm:$0xff]
        %v218 = vld [vmem:[#allocation5 + $0x70] sm:$0xff]
        %v219 = vld [vmem:[#allocation5 + $0x78] sm:$0xff]
        %v220 = vld [vmem:[#allocation5 + $0x80] sm:$0xff]
        %v221 = vld [vmem:[#allocation5 + $0x88] sm:$0xff]
        %v222 = vld [vmem:[#allocation5 + $0x90] sm:$0xff]
        %v223 = vld [vmem:[#allocation5 + $0x98] sm:$0xff]
        %v224 = vld [vmem:[#allocation5 + $0xa0] sm:$0xff]
        %v225 = vld [vmem:[#allocation5 + $0xa8] sm:$0xff]
        %v226 = vld [vmem:[#allocation5 + $0xb0] sm:$0xff]
        %v227 = vld [vmem:[#allocation5 + $0xb8] sm:$0xff]
        %v228 = vld [vmem:[#allocation5 + $0xc0] sm:$0xff]
        %v229 = vld [vmem:[#allocation5 + $0xc8] sm:$0xff]
        %v230 = vld [vmem:[#allocation5 + $0xd0] sm:$0xff]
        %v231 = vld [vmem:[#allocation5 + $0xd8] sm:$0xff]
        %v232 = vld [vmem:[#allocation5 + $0xe0] sm:$0xff]
        %v233 = vld [vmem:[#allocation5 + $0xe8] sm:$0xff]
        %v234 = vld [vmem:[#allocation5 + $0xf0] sm:$0xff]
        %v235 = vld [vmem:[#allocation5 + $0xf8] sm:$0xff]
        %v236 = vld [vmem:[#allocation5 + $0x100] sm:$0xff]
        %v237 = vld [vmem:[#allocation5 + $0x108] sm:$0xff]
        %v238 = vld [vmem:[#allocation5 + $0x110] sm:$0xff]
        %v239 = vld [vmem:[#allocation5 + $0x118] sm:$0xff]
        %v240 = vld [vmem:[#allocation5 + $0x120] sm:$0xff]
        %v241 = vld [vmem:[#allocation5 + $0x128] sm:$0xff]
        %v242 = vld [vmem:[#allocation5 + $0x130] sm:$0xff]
        %v243 = vld [vmem:[#allocation5 + $0x138] sm:$0xff]
        %v244 = vld [vmem:[#allocation5 + $0x140] sm:$0xff]
        %v245 = vld [vmem:[#allocation5 + $0x148] sm:$0xff]
        %v246 = vld [vmem:[#allocation5 + $0x150] sm:$0xff]
        %v247 = vld [vmem:[#allocation5 + $0x158] sm:$0xff]
        %v248 = vld [vmem:[#allocation5 + $0x160] sm:$0xff]
        %v249 = vld [vmem:[#allocation5 + $0x168] sm:$0xff]
        %v250 = vld [vmem:[#allocation5 + $0x170] sm:$0xff]
        %v251 = vld [vmem:[#allocation5 + $0x178] sm:$0xff]
        %v252 = vld [vmem:[#allocation5 + $0x180] sm:$0xff]
        %v253 = vld [vmem:[#allocation5 + $0x188] sm:$0xff]
        %v254 = vld [vmem:[#allocation5 + $0x190] sm:$0xff]
        %v255 = vld [vmem:[#allocation5 + $0x198] sm:$0xff]
        %v256 = vld [vmem:[#allocation5 + $0x1a0] sm:$0xff]
        %v257 = vld [vmem:[#allocation5 + $0x1a8] sm:$0xff]
        %v258 = vld [vmem:[#allocation5 + $0x1b0] sm:$0xff]
        %v259 = vld [vmem:[#allocation5 + $0x1b8] sm:$0xff]
        %v260 = vld [vmem:[#allocation5 + $0x1c0] sm:$0xff]
        %v261 = vld [vmem:[#allocation5 + $0x1c8] sm:$0xff]
        %v262 = vld [vmem:[#allocation5 + $0x1d0] sm:$0xff]
        %v263 = vld [vmem:[#allocation5 + $0x1d8] sm:$0xff]
        %v264 = vld [vmem:[#allocation5 + $0x1e0] sm:$0xff]
        %v265 = vld [vmem:[#allocation5 + $0x1e8] sm:$0xff]
        %v266 = vld [vmem:[#allocation5 + $0x1f0] sm:$0xff]
        %v267 = vld [vmem:[#allocation5 + $0x1f8] sm:$0xff]
        %v268 = vld [vmem:[#allocation5 + $0x200] sm:$0xff]
        %v269 = vld [vmem:[#allocation5 + $0x208] sm:$0xff]
        %v270 = vld [vmem:[#allocation5 + $0x210] sm:$0xff]
        %v271 = vld [vmem:[#allocation5 + $0x218] sm:$0xff]
        %v272 = vld [vmem:[#allocation5 + $0x220] sm:$0xff]
        %v273 = vld [vmem:[#allocation5 + $0x228] sm:$0xff]
        %v274 = vld [vmem:[#allocation5 + $0x230] sm:$0xff]
        %v275 = vld [vmem:[#allocation5 + $0x238] sm:$0xff]
        %v276 = vld [vmem:[#allocation5 + $0x240] sm:$0xff]
        %v277 = vld [vmem:[#allocation5 + $0x248] sm:$0xff]
        %v278 = vld [vmem:[#allocation5 + $0x250] sm:$0xff]
        %v279 = vld [vmem:[#allocation5 + $0x258] sm:$0xff]
        %v280 = vld [vmem:[#allocation5 + $0x260] sm:$0xff]
        %v281 = vld [vmem:[#allocation5 + $0x268] sm:$0xff]
        %v282 = vld [vmem:[#allocation5 + $0x270] sm:$0xff]
        %v283 = vld [vmem:[#allocation5 + $0x278] sm:$0xff]
        %v284 = vld [vmem:[#allocation5 + $0x280] sm:$0xff]
        %v285 = vld [vmem:[#allocation5 + $0x288] sm:$0xff]
        %v286 = vld [vmem:[#allocation5 + $0x290] sm:$0xff]
        %v287 = vld [vmem:[#allocation5 + $0x298] sm:$0xff]
        %v288 = vld [vmem:[#allocation5 + $0x2a0] sm:$0xff]
        %v289 = vld [vmem:[#allocation5 + $0x2a8] sm:$0xff]
        %v290 = vld [vmem:[#allocation5 + $0x2b0] sm:$0xff]
        %v291 = vld [vmem:[#allocation5 + $0x2b8] sm:$0xff]
        %v292 = vld [vmem:[#allocation5 + $0x2c0] sm:$0xff]
        %v293 = vld [vmem:[#allocation5 + $0x2c8] sm:$0xff]
        %v294 = vld [vmem:[#allocation5 + $0x2d0] sm:$0xff]
        %v295 = vld [vmem:[#allocation5 + $0x2d8] sm:$0xff]
        %v296 = vld [vmem:[#allocation5 + $0x2e0] sm:$0xff]
        %v297 = vld [vmem:[#allocation5 + $0x2e8] sm:$0xff]
        %v298 = vld [vmem:[#allocation5 + $0x2f0] sm:$0xff]
        %v299 = vld [vmem:[#allocation5 + $0x2f8] sm:$0xff]
        %v300 = vld [vmem:[#allocation5 + $0x300] sm:$0xff]
        %v301 = vld [vmem:[#allocation5 + $0x308] sm:$0xff]
        %v302 = vld [vmem:[#allocation5 + $0x310] sm:$0xff]
        %v303 = vld [vmem:[#allocation5 + $0x318] sm:$0xff]
        %v304 = vld [vmem:[#allocation5 + $0x320] sm:$0xff]
        %v305 = vld [vmem:[#allocation5 + $0x328] sm:$0xff]
        %v306 = vld [vmem:[#allocation5 + $0x330] sm:$0xff]
        %v307 = vld [vmem:[#allocation5 + $0x338] sm:$0xff]
        %v308 = vld [vmem:[#allocation5 + $0x340] sm:$0xff]
        %v309 = vld [vmem:[#allocation5 + $0x348] sm:$0xff]
        %v310 = vld [vmem:[#allocation5 + $0x350] sm:$0xff]
        %v311 = vld [vmem:[#allocation5 + $0x358] sm:$0xff]
        %v312 = vld [vmem:[#allocation5 + $0x360] sm:$0xff]
        %v313 = vld [vmem:[#allocation5 + $0x368] sm:$0xff]
        %v314 = vld [vmem:[#allocation5 + $0x370] sm:$0xff]
        %v315 = vld [vmem:[#allocation5 + $0x378] sm:$0xff]
        %v316 = vld [vmem:[#allocation5 + $0x380] sm:$0xff]
        %v317 = vld [vmem:[#allocation5 + $0x388] sm:$0xff]
        %v318 = vld [vmem:[#allocation5 + $0x390] sm:$0xff]
        %v319 = vld [vmem:[#allocation5 + $0x398] sm:$0xff]
        %v320 = vld [vmem:[#allocation5 + $0x3a0] sm:$0xff]
        %v321 = vld [vmem:[#allocation5 + $0x3a8] sm:$0xff]
        %v322 = vld [vmem:[#allocation5 + $0x3b0] sm:$0xff]
        %v323 = vld [vmem:[#allocation5 + $0x3b8] sm:$0xff]
        %v324 = vld [vmem:[#allocation5 + $0x3c0] sm:$0xff]
        %v325 = vld [vmem:[#allocation5 + $0x3c8] sm:$0xff]
        %v326 = vld [vmem:[#allocation5 + $0x3d0] sm:$0xff]
        %v327 = vld [vmem:[#allocation5 + $0x3d8] sm:$0xff]
        %v328 = vld [vmem:[#allocation5 + $0x3e0] sm:$0xff]
        %v329 = vld [vmem:[#allocation5 + $0x3e8] sm:$0xff]
        %v330 = vld [vmem:[#allocation5 + $0x3f0] sm:$0xff]
        %v331 = vld [vmem:[#allocation5 + $0x3f8] sm:$0xff]
        %v332 = vld [vmem:[#allocation5 + $0x400] sm:$0xff]
        %v333 = vld [vmem:[#allocation5 + $0x408] sm:$0xff]
        %v334 = vld [vmem:[#allocation5 + $0x410] sm:$0xff]
        %v335 = vld [vmem:[#allocation5 + $0x418] sm:$0xff]
        %v336 = vld [vmem:[#allocation5 + $0x420] sm:$0xff]
        %v337 = vld [vmem:[#allocation5 + $0x428] sm:$0xff]
        %v338 = vld [vmem:[#allocation5 + $0x430] sm:$0xff]
        %v339 = vld [vmem:[#allocation5 + $0x438] sm:$0xff]
        %v340 = vld [vmem:[#allocation5 + $0x440] sm:$0xff]
        %v341 = vld [vmem:[#allocation5 + $0x448] sm:$0xff]
        %v342 = vld [vmem:[#allocation5 + $0x450] sm:$0xff]
        %v343 = vld [vmem:[#allocation5 + $0x458] sm:$0xff]
        %v344 = vld [vmem:[#allocation5 + $0x460] sm:$0xff]
        %v345 = vld [vmem:[#allocation5 + $0x468] sm:$0xff]
        %v346 = vld [vmem:[#allocation5 + $0x470] sm:$0xff]
        %v347 = vld [vmem:[#allocation5 + $0x478] sm:$0xff]
        %v348 = vld [vmem:[#allocation5 + $0x480] sm:$0xff]
        %v349 = vld [vmem:[#allocation5 + $0x488] sm:$0xff]
        %v350 = vld [vmem:[#allocation5 + $0x490] sm:$0xff]
        %v351 = vld [vmem:[#allocation5 + $0x498] sm:$0xff]
        %v352 = vld [vmem:[#allocation5 + $0x4a0] sm:$0xff]
        %v353 = vld [vmem:[#allocation5 + $0x4a8] sm:$0xff]
        %v354 = vld [vmem:[#allocation5 + $0x4b0] sm:$0xff]
        %v355 = vld [vmem:[#allocation5 + $0x4b8] sm:$0xff]
        %v356 = vld [vmem:[#allocation5 + $0x4c0] sm:$0xff]
        %v357 = vld [vmem:[#allocation5 + $0x4c8] sm:$0xff]
        %v358 = vld [vmem:[#allocation5 + $0x4d0] sm:$0xff]
        %v359 = vld [vmem:[#allocation5 + $0x4d8] sm:$0xff]
        %v360 = vld [vmem:[#allocation5 + $0x4e0] sm:$0xff]
        %v361 = vld [vmem:[#allocation5 + $0x4e8] sm:$0xff]
        %v362 = vld [vmem:[#allocation5 + $0x4f0] sm:$0xff]
        %v363 = vld [vmem:[#allocation5 + $0x4f8] sm:$0xff]
        %v364 = vld [vmem:[#allocation5 + $0x500] sm:$0xff]
        %v365 = vld [vmem:[#allocation5 + $0x508] sm:$0xff]
        %v366 = vld [vmem:[#allocation5 + $0x510] sm:$0xff]
        %v367 = vld [vmem:[#allocation5 + $0x518] sm:$0xff]
        %v368 = vld [vmem:[#allocation5 + $0x520] sm:$0xff]
        %v369 = vld [vmem:[#allocation5 + $0x528] sm:$0xff]
        %v370 = vld [vmem:[#allocation5 + $0x530] sm:$0xff]
        %v371 = vld [vmem:[#allocation5 + $0x538] sm:$0xff]
        %v372 = vld [vmem:[#allocation5 + $0x540] sm:$0xff]
        %v373 = vld [vmem:[#allocation5 + $0x548] sm:$0xff]
        %v374 = vld [vmem:[#allocation5 + $0x550] sm:$0xff]
        %v375 = vld [vmem:[#allocation5 + $0x558] sm:$0xff]
        %v376 = vld [vmem:[#allocation5 + $0x560] sm:$0xff]
        %v377 = vld [vmem:[#allocation5 + $0x568] sm:$0xff]
        %v378 = vld [vmem:[#allocation5 + $0x570] sm:$0xff]
        %v379 = vld [vmem:[#allocation5 + $0x578] sm:$0xff]
        %v380 = vld [vmem:[#allocation5 + $0x580] sm:$0xff]
        %v381 = vld [vmem:[#allocation5 + $0x588] sm:$0xff]
        %v382 = vld [vmem:[#allocation5 + $0x590] sm:$0xff]
        %v383 = vld [vmem:[#allocation5 + $0x598] sm:$0xff]
        %v384 = vld [vmem:[#allocation5 + $0x5a0] sm:$0xff]
        %v385 = vld [vmem:[#allocation5 + $0x5a8] sm:$0xff]
        %v386 = vld [vmem:[#allocation5 + $0x5b0] sm:$0xff]
        %v387 = vld [vmem:[#allocation5 + $0x5b8] sm:$0xff]
        %v388 = vld [vmem:[#allocation5 + $0x5c0] sm:$0xff]
        %v389 = vld [vmem:[#allocation5 + $0x5c8] sm:$0xff]
        %v390 = vld [vmem:[#allocation5 + $0x5d0] sm:$0xff]
        %v391 = vld [vmem:[#allocation5 + $0x5d8] sm:$0xff]
        %v392 = vld [vmem:[#allocation5 + $0x5e0] sm:$0xff]
        %v393 = vld [vmem:[#allocation5 + $0x5e8] sm:$0xff]
        %v394 = vld [vmem:[#allocation5 + $0x5f0] sm:$0xff]
        %v395 = vld [vmem:[#allocation5 + $0x5f8] sm:$0xff]
        %vm396 = vcmask 523264
        %v398 = vsel %vm396, %v203, 0
        %400 = vmatprep.subr.mxu0 %v205
        %401 = vmatpush1.msra.mxu0 %v204
        %402 = vmatprep.subr.mxu0 %v213
        %403 = vmatpush1.msra.mxu0 %v212
        %404 = vmatprep.subr.mxu0 %v221
        %405 = vmatpush1.msra.mxu0 %v220
        %406 = vmatprep.subr.mxu0 %v229
        %407 = vmatpush1.msra.mxu0 %v228
        %408 = vmatprep.subr.mxu0 %v237
        %409 = vmatpush1.msra.mxu0 %v236
        %410 = vmatprep.subr.mxu0 %v245
        %411 = vmatpush1.msra.mxu0 %v244
        %412 = vmatprep.subr.mxu0 %v253
        %413 = vmatpush1.msra.mxu0 %v252
        %414 = vmatprep.subr.mxu0 %v261
        %415 = vmatpush1.msra.mxu0 %v260
        %416 = vmatprep.subr.mxu0 %v269
        %417 = vmatpush1.msra.mxu0 %v268
        %418 = vmatprep.subr.mxu0 %v277
        %419 = vmatpush1.msra.mxu0 %v276
        %420 = vmatprep.subr.mxu0 %v285
        %421 = vmatpush1.msra.mxu0 %v284
        %422 = vmatprep.subr.mxu0 %v293
        %423 = vmatpush1.msra.mxu0 %v292
        %424 = vmatprep.subr.mxu0 %v301
        %425 = vmatpush1.msra.mxu0 %v300
        %426 = vmatprep.subr.mxu0 %v309
        %427 = vmatpush1.msra.mxu0 %v308
        %428 = vmatprep.subr.mxu0 %v317
        %429 = vmatpush1.msra.mxu0 %v316
        %430 = vmatprep.subr.mxu0 %v325
        %431 = vmatpush1.msra.mxu0 %v324
        %432 = vmatprep.subr.mxu0 %v333
        %433 = vmatpush1.msra.mxu0 %v332
        %434 = vmatprep.subr.mxu0 %v341
        %435 = vmatpush1.msra.mxu0 %v340
        %436 = vmatprep.subr.mxu0 %v349
        %437 = vmatpush1.msra.mxu0 %v348
        %438 = vmatprep.subr.mxu0 %v357
        %439 = vmatpush1.msra.mxu0 %v356
        %440 = vmatprep.subr.mxu0 %v365
        %441 = vmatpush1.msra.mxu0 %v364
        %442 = vmatprep.subr.mxu0 %v373
        %443 = vmatpush1.msra.mxu0 %v372
        %444 = vmatprep.subr.mxu0 %v381
        %445 = vmatpush1.msra.mxu0 %v380
        %446 = vmatprep.subr.mxu0 %v389
        %447 = vmatpush1.msra.mxu0 %v388
        %448 = vmatprep.subr.mxu0 0.0
        %449 = vmatpush1.msra.mxu0 0.0
        %450 = vmatprep.subr.mxu0 0.0
        %451 = vmatpush1.msra.mxu0 0.0
        %452 = vmatprep.subr.mxu0 0.0
        %453 = vmatpush1.msra.mxu0 0.0
        %454 = vmatprep.subr.mxu0 0.0
        %455 = vmatpush1.msra.mxu0 0.0
        %456 = vmatprep.subr.mxu0 0.0
        %457 = vmatpush1.msra.mxu0 0.0
        %458 = vmatprep.subr.mxu0 0.0
        %459 = vmatpush1.msra.mxu0 0.0
        %460 = vmatprep.subr.mxu0 0.0
        %461 = vmatpush1.msra.mxu0 0.0
        %462 = vmatprep.subr.mxu0 0.0
        %463 = vmatpush1.msra.mxu0 0.0
        %464 = vmatprep.mubr.f32.mxu0 %v398
        %465 = vmatmul.mubr.f32.gmra.mrb[0].mxu0 %v202
        %v466 = vpop.f32.mrb[0].mxu0
        %v467 = vadd.f32 0.0, %v466
        %v468 = vpop.f32.mrb[0].mxu0
        %v469 = vadd.f32 0.0, %v468
        %470 = vdwg.mxu0
        %471 = vmatprep.subr.mxu0 %v207
        %472 = vmatpush1.msra.mxu0 %v206
        %473 = vmatprep.subr.mxu0 %v215
        %474 = vmatpush1.msra.mxu0 %v214
        %475 = vmatprep.subr.mxu0 %v223
        %476 = vmatpush1.msra.mxu0 %v222
        %477 = vmatprep.subr.mxu0 %v231
        %478 = vmatpush1.msra.mxu0 %v230
        %479 = vmatprep.subr.mxu0 %v239
        %480 = vmatpush1.msra.mxu0 %v238
        %481 = vmatprep.subr.mxu0 %v247
        %482 = vmatpush1.msra.mxu0 %v246
        %483 = vmatprep.subr.mxu0 %v255
        %484 = vmatpush1.msra.mxu0 %v254
        %485 = vmatprep.subr.mxu0 %v263
        %486 = vmatpush1.msra.mxu0 %v262
        %487 = vmatprep.subr.mxu0 %v271
        %488 = vmatpush1.msra.mxu0 %v270
        %489 = vmatprep.subr.mxu0 %v279
        %490 = vmatpush1.msra.mxu0 %v278
        %491 = vmatprep.subr.mxu0 %v287
        %492 = vmatpush1.msra.mxu0 %v286
        %493 = vmatprep.subr.mxu0 %v295
        %494 = vmatpush1.msra.mxu0 %v294
        %495 = vmatprep.subr.mxu0 %v303
        %496 = vmatpush1.msra.mxu0 %v302
        %497 = vmatprep.subr.mxu0 %v311
        %498 = vmatpush1.msra.mxu0 %v310
        %499 = vmatprep.subr.mxu0 %v319
        %500 = vmatpush1.msra.mxu0 %v318
        %501 = vmatprep.subr.mxu0 %v327
        %502 = vmatpush1.msra.mxu0 %v326
        %503 = vmatprep.subr.mxu0 %v335
        %504 = vmatpush1.msra.mxu0 %v334
        %505 = vmatprep.subr.mxu0 %v343
        %506 = vmatpush1.msra.mxu0 %v342
        %507 = vmatprep.subr.mxu0 %v351
        %508 = vmatpush1.msra.mxu0 %v350
        %509 = vmatprep.subr.mxu0 %v359
        %510 = vmatpush1.msra.mxu0 %v358
        %511 = vmatprep.subr.mxu0 %v367
        %512 = vmatpush1.msra.mxu0 %v366
        %513 = vmatprep.subr.mxu0 %v375
        %514 = vmatpush1.msra.mxu0 %v374
        %515 = vmatprep.subr.mxu0 %v383
        %516 = vmatpush1.msra.mxu0 %v382
        %517 = vmatprep.subr.mxu0 %v391
        %518 = vmatpush1.msra.mxu0 %v390
        %519 = vmatprep.subr.mxu0 0.0
        %520 = vmatpush1.msra.mxu0 0.0
        %521 = vmatprep.subr.mxu0 0.0
        %522 = vmatpush1.msra.mxu0 0.0
        %523 = vmatprep.subr.mxu0 0.0
        %524 = vmatpush1.msra.mxu0 0.0
        %525 = vmatprep.subr.mxu0 0.0
        %526 = vmatpush1.msra.mxu0 0.0
        %527 = vmatprep.subr.mxu0 0.0
        %528 = vmatpush1.msra.mxu0 0.0
        %529 = vmatprep.subr.mxu0 0.0
        %530 = vmatpush1.msra.mxu0 0.0
        %531 = vmatprep.subr.mxu0 0.0
        %532 = vmatpush1.msra.mxu0 0.0
        %533 = vmatprep.subr.mxu0 0.0
        %534 = vmatpush1.msra.mxu0 0.0
        %535 = vmatprep.mubr.f32.mxu0 %v398
        %536 = vmatmul.mubr.f32.gmra.mrb[0].mxu0 %v202
        %v537 = vpop.f32.mrb[0].mxu0
        %v538 = vadd.f32 0.0, %v537
        %v539 = vpop.f32.mrb[0].mxu0
        %v540 = vadd.f32 0.0, %v539
        %541 = vdwg.mxu0
        %542 = vmatprep.subr.mxu0 %v209
        %543 = vmatpush1.msra.mxu0 %v208
        %544 = vmatprep.subr.mxu0 %v217
        %545 = vmatpush1.msra.mxu0 %v216
        %546 = vmatprep.subr.mxu0 %v225
        %547 = vmatpush1.msra.mxu0 %v224
        %548 = vmatprep.subr.mxu0 %v233
        %549 = vmatpush1.msra.mxu0 %v232
        %550 = vmatprep.subr.mxu0 %v241
        %551 = vmatpush1.msra.mxu0 %v240
        %552 = vmatprep.subr.mxu0 %v249
        %553 = vmatpush1.msra.mxu0 %v248
        %554 = vmatprep.subr.mxu0 %v257
        %555 = vmatpush1.msra.mxu0 %v256
        %556 = vmatprep.subr.mxu0 %v265
        %557 = vmatpush1.msra.mxu0 %v264
        %558 = vmatprep.subr.mxu0 %v273
        %559 = vmatpush1.msra.mxu0 %v272
        %560 = vmatprep.subr.mxu0 %v281
        %561 = vmatpush1.msra.mxu0 %v280
        %562 = vmatprep.subr.mxu0 %v289
        %563 = vmatpush1.msra.mxu0 %v288
        %564 = vmatprep.subr.mxu0 %v297
        %565 = vmatpush1.msra.mxu0 %v296
        %566 = vmatprep.subr.mxu0 %v305
        %567 = vmatpush1.msra.mxu0 %v304
        %568 = vmatprep.subr.mxu0 %v313
        %569 = vmatpush1.msra.mxu0 %v312
        %570 = vmatprep.subr.mxu0 %v321
        %571 = vmatpush1.msra.mxu0 %v320
        %572 = vmatprep.subr.mxu0 %v329
        %573 = vmatpush1.msra.mxu0 %v328
        %574 = vmatprep.subr.mxu0 %v337
        %575 = vmatpush1.msra.mxu0 %v336
        %576 = vmatprep.subr.mxu0 %v345
        %577 = vmatpush1.msra.mxu0 %v344
        %578 = vmatprep.subr.mxu0 %v353
        %579 = vmatpush1.msra.mxu0 %v352
        %580 = vmatprep.subr.mxu0 %v361
        %581 = vmatpush1.msra.mxu0 %v360
        %582 = vmatprep.subr.mxu0 %v369
        %583 = vmatpush1.msra.mxu0 %v368
        %584 = vmatprep.subr.mxu0 %v377
        %585 = vmatpush1.msra.mxu0 %v376
        %586 = vmatprep.subr.mxu0 %v385
        %587 = vmatpush1.msra.mxu0 %v384
        %588 = vmatprep.subr.mxu0 %v393
        %589 = vmatpush1.msra.mxu0 %v392
        %590 = vmatprep.subr.mxu0 0.0
        %591 = vmatpush1.msra.mxu0 0.0
        %592 = vmatprep.subr.mxu0 0.0
        %593 = vmatpush1.msra.mxu0 0.0
        %594 = vmatprep.subr.mxu0 0.0
        %595 = vmatpush1.msra.mxu0 0.0
        %596 = vmatprep.subr.mxu0 0.0
        %597 = vmatpush1.msra.mxu0 0.0
        %598 = vmatprep.subr.mxu0 0.0
        %599 = vmatpush1.msra.mxu0 0.0
        %600 = vmatprep.subr.mxu0 0.0
        %601 = vmatpush1.msra.mxu0 0.0
        %602 = vmatprep.subr.mxu0 0.0
        %603 = vmatpush1.msra.mxu0 0.0
        %604 = vmatprep.subr.mxu0 0.0
        %605 = vmatpush1.msra.mxu0 0.0
        %606 = vmatprep.mubr.f32.mxu0 %v398
        %607 = vmatmul.mubr.f32.gmra.mrb[0].mxu0 %v202
        %v608 = vpop.f32.mrb[0].mxu0
        %v609 = vadd.f32 0.0, %v608
        %v610 = vpop.f32.mrb[0].mxu0
        %v611 = vadd.f32 0.0, %v610
        %612 = vdwg.mxu0
        %613 = vmatprep.subr.mxu0 %v211
        %614 = vmatpush1.msra.mxu0 %v210
        %615 = vmatprep.subr.mxu0 %v219
        %616 = vmatpush1.msra.mxu0 %v218
        %617 = vmatprep.subr.mxu0 %v227
        %618 = vmatpush1.msra.mxu0 %v226
        %619 = vmatprep.subr.mxu0 %v235
        %620 = vmatpush1.msra.mxu0 %v234
        %621 = vmatprep.subr.mxu0 %v243
        %622 = vmatpush1.msra.mxu0 %v242
        %623 = vmatprep.subr.mxu0 %v251
        %624 = vmatpush1.msra.mxu0 %v250
        %625 = vmatprep.subr.mxu0 %v259
        %626 = vmatpush1.msra.mxu0 %v258
        %627 = vmatprep.subr.mxu0 %v267
        %628 = vmatpush1.msra.mxu0 %v266
        %629 = vmatprep.subr.mxu0 %v275
        %630 = vmatpush1.msra.mxu0 %v274
        %631 = vmatprep.subr.mxu0 %v283
        %632 = vmatpush1.msra.mxu0 %v282
        %633 = vmatprep.subr.mxu0 %v291
        %634 = vmatpush1.msra.mxu0 %v290
        %635 = vmatprep.subr.mxu0 %v299
        %636 = vmatpush1.msra.mxu0 %v298
        %637 = vmatprep.subr.mxu0 %v307
        %638 = vmatpush1.msra.mxu0 %v306
        %639 = vmatprep.subr.mxu0 %v315
        %640 = vmatpush1.msra.mxu0 %v314
        %641 = vmatprep.subr.mxu0 %v323
        %642 = vmatpush1.msra.mxu0 %v322
        %643 = vmatprep.subr.mxu0 %v331
        %644 = vmatpush1.msra.mxu0 %v330
        %645 = vmatprep.subr.mxu0 %v339
        %646 = vmatpush1.msra.mxu0 %v338
        %647 = vmatprep.subr.mxu0 %v347
        %648 = vmatpush1.msra.mxu0 %v346
        %649 = vmatprep.subr.mxu0 %v355
        %650 = vmatpush1.msra.mxu0 %v354
        %651 = vmatprep.subr.mxu0 %v363
        %652 = vmatpush1.msra.mxu0 %v362
        %653 = vmatprep.subr.mxu0 %v371
        %654 = vmatpush1.msra.mxu0 %v370
        %655 = vmatprep.subr.mxu0 %v379
        %656 = vmatpush1.msra.mxu0 %v378
        %657 = vmatprep.subr.mxu0 %v387
        %658 = vmatpush1.msra.mxu0 %v386
        %659 = vmatprep.subr.mxu0 %v395
        %660 = vmatpush1.msra.mxu0 %v394
        %661 = vmatprep.subr.mxu0 0.0
        %662 = vmatpush1.msra.mxu0 0.0
        %663 = vmatprep.subr.mxu0 0.0
        %664 = vmatpush1.msra.mxu0 0.0
        %665 = vmatprep.subr.mxu0 0.0
        %666 = vmatpush1.msra.mxu0 0.0
        %667 = vmatprep.subr.mxu0 0.0
        %668 = vmatpush1.msra.mxu0 0.0
        %669 = vmatprep.subr.mxu0 0.0
        %670 = vmatpush1.msra.mxu0 0.0
        %671 = vmatprep.subr.mxu0 0.0
        %672 = vmatpush1.msra.mxu0 0.0
        %673 = vmatprep.subr.mxu0 0.0
        %674 = vmatpush1.msra.mxu0 0.0
        %675 = vmatprep.subr.mxu0 0.0
        %676 = vmatpush1.msra.mxu0 0.0
        %677 = vmatprep.mubr.f32.mxu0 %v398
        %678 = vmatmul.mubr.f32.gmra.mrb[0].mxu0 %v202
        %v679 = vpop.f32.mrb[0].mxu0
        %v680 = vadd.f32 0.0, %v679
        %v681 = vpop.f32.mrb[0].mxu0
        %v682 = vadd.f32 0.0, %v681
        %683 = vdwg.mxu0
        %v684 = vmax.f32 %v467, %v469
        %v685 = vmax.f32 %v684, %v538
        %v686 = vmax.f32 %v685, %v540
        %v687 = vmax.f32 %v686, %v609
        %v688 = vmax.f32 %v687, %v611
        %v689 = vmax.f32 %v688, %v680
        %v690 = vmax.f32 %v689, %v682
        %v691 = vld [vmem:[%s2] sm:$0x1]
        %v693 = vlaneseq
        %v694 = vshrl.u32 %v693, 7
        %v695 = vsub.s32 0, %v694
        %v696 = vrot.slane %v691, %v695
        %v698 = vadd.f32 %v690, %v696
        %v699 = vmax.f32 %v698, 0.0
        %700 = vst [vmem:[%s201] sm:$0xff] %v699
        %s701 = sand.u32 %s97, 1
        %s702 = scalar_lea.sflag [#allocation4], %s701
        %s703 = sand.u32 %s97, 1
        %s704 = smul.addr %s703, 8
        %s705 = scalar_lea.vmem [#allocation7], %s704
        // Predicated region
        $region41: #{tpu_custom_call.1} parent=31 // pred_check
          %p706 = pneg %p107
        $region42: #{tpu_custom_call.1} parent=31 // pred_check_branch
          %708 = sbr.rel (%p706) target = $region44
        $region43: #{tpu_custom_call.1} parent=31 // pred_region
          %s710 = ssub.s32 128, 128
          %711 = vsyncadd %s702, %s710
          %s712 = smul.addr %s21, 128
          %s713 = scalar_lea.hbm %s3, %s712
          %s715 = sshll.u32 %s705, 4
          %s716 = int_to_ptr.vmem [resolvable:$true] %s715
          %718 = dma.vmem_to_hbm [thread:$0]  %s716, 128, %s713, %s702
        $region44: #{tpu_custom_call.1} parent=31 // pred_fallthru
          _
      $region32: #{tpu_custom_call.1} parent=5 // pred_fallthru
        _
      %p719 = scmp.le.s32.totalorder 2, %s16
      // Predicated region
      $region45: #{tpu_custom_call.1} parent=5 // pred_check
        %p720 = pneg %p719
      $region46: #{tpu_custom_call.1} parent=5 // pred_check_branch
        %722 = sbr.rel (%p720) target = $region48
      $region47: #{tpu_custom_call.1} parent=5 // pred_region
        %s723 = ssub.s32 %s16, 2
        // Predicated region
        $region49: #{tpu_custom_call.1} parent=47 // pred_check
          %p724 = pneg %p113
        $region50: #{tpu_custom_call.1} parent=47 // pred_check_branch
          %726 = sbr.rel (%p724) target = $region52
        $region51: #{tpu_custom_call.1} parent=47 // pred_region
          %s727 = sand.u32 %s98, 1
          %s728 = scalar_lea.sflag [#allocation4], %s727
          %s729 = sand.u32 %s98, 1
          %s730 = smul.addr %s729, 8
          %s731 = scalar_lea.vmem [#allocation7], %s730
          %732 = dma.done %s728, 128
        $region52: #{tpu_custom_call.1} parent=47 // pred_fallthru
          _
      $region48: #{tpu_custom_call.1} parent=5 // pred_fallthru
        _
    $region6: #{tpu_custom_call.1} parent=1 // loop_footer
      %s20 = sadd.s32 1, %s16
    $region7: #{tpu_custom_call.1} parent=1 // loop_footer_branch
      %15 = sbr.rel target = $region3
    $region8: #{tpu_custom_call.1} parent=1 // loop_exit
      _
    %733 = vsyncpa [#allocation3], 1
    %s734 = scalar_lea.sflag [#allocation3], 1
    %735 = vsyncpa %s734, 1
    %736 = vsyncpa [#allocation6], 1
    %737 = vsyncpa [#allocation4], 1
    %s738 = scalar_lea.sflag [#allocation4], 1
    %739 = vsyncpa %s738, 1

</llo_original>
